<compile_context>
chip_gen: v7x
topology: tpu7x:2x2x1
jax: 0.10.0
libtpu: 0.0.40
codegen_flags: <defaults>
</compile_context>

<pallas_src>
import functools

import numpy as np

import jax
import jax.numpy as jnp
from jax import lax
from jax.experimental import pallas as pl
from jax.experimental.pallas import tpu as pltpu


def _c32(k: int) -> np.int32:
    """Python int -> int32 constant with two's-complement wrapping."""
    k &= 0xFFFFFFFF
    if k >= 0x80000000:
        k -= 0x100000000
    return np.int32(k)


_GOLD = _c32(0x9E3779B9)          # golden-ratio increment
_MIX1 = _c32(0x85EBCA6B)          # murmur3 fmix32 constants
_MIX2 = _c32(0xC2B2AE35)
_LOW16 = np.int32(0xFFFF)
_NUM_WORDS = 4                    # 4 hash words -> 8 x 16-bit uniforms / element
# Scale so the sum of 2*_NUM_WORDS uniforms on {0..65535} has unit std.
_CLT_SCALE = float(np.sqrt(6.0 / _NUM_WORDS) / 65536.0)


def _fmix32(x):
    """murmur3 finalizer: int32 -> well-mixed int32 (logical shifts only)."""
    x = x ^ lax.shift_right_logical(x, np.int32(16))
    x = x * _MIX1
    x = x ^ lax.shift_right_logical(x, np.int32(13))
    x = x * _MIX2
    x = x ^ lax.shift_right_logical(x, np.int32(16))
    return x


def _gaussian_noise_kernel(seed_ref, x_ref, o_ref, *, sigma):
    tile_r, lanes = x_ref.shape

    # Global flat element index: grid-invariant counter => identical noise no
    # matter how the slab is tiled, and distinct noise in every grid block.
    base = pl.program_id(0) * (tile_r * lanes)
    ridx = lax.broadcasted_iota(jnp.int32, (tile_r, lanes), 0)
    cidx = lax.broadcasted_iota(jnp.int32, (tile_r, lanes), 1)
    idx = base + ridx * np.int32(lanes) + cidx

    seed = seed_ref[0]
    state = _fmix32(idx ^ (seed * _GOLD))

    # CLT normal approximation: sum of 8 iid 16-bit uniforms (two per hash word).
    acc = jnp.zeros((tile_r, lanes), jnp.float32)
    for _ in range(_NUM_WORDS):
        state = _fmix32(state + _GOLD)
        acc = acc + (state & _LOW16).astype(jnp.float32)
        acc = acc + lax.shift_right_logical(state, np.int32(16)).astype(jnp.float32)

    noise = (acc - jnp.float32(_NUM_WORDS * 65535.0)) * jnp.float32(sigma * _CLT_SCALE)
    o_ref[...] = (x_ref[...].astype(jnp.float32) + noise).astype(o_ref.dtype)


def _pick_lanes(n):
    """Widest lane-dense slab width (multiple of 128) and required tail pad."""
    for w in (1024, 512, 256, 128):
        if n % w == 0:
            return w, 0
    return 128, (-n) % 128      # pad only the last partial 128-lane row


def gaussian_noise(x, sigma, seed, training=True):
    """Pallas implementation of GaussianNoise.forward.

    NOTE: pass a fresh `seed` every training step (e.g. the step counter);
    reusing a seed reuses the same noise tensor.
    """
    if not training:
        return x

    orig_shape = x.shape
    orig_dtype = x.dtype
    n = x.size

    lanes, pad = _pick_lanes(n)
    flat = x.reshape(-1)
    if pad:
        flat = jnp.pad(flat, (0, pad))
    rows = flat.shape[0] // lanes
    x2d = flat.reshape(rows, lanes)

    # ~2 MiB (f32) blocks: large enough to amortize the ~0.35 us/step pipeline
    # overhead, small enough to double-buffer (in + out) well under the 32 MiB
    # default scoped VMEM limit on every generation (incl. v7x).
    tile_r = min(rows, max(8, (512 * 1024) // lanes))
    grid = (pl.cdiv(rows, tile_r),)

    seed_arr = jnp.asarray([seed], dtype=jnp.int32)

    out2d = pl.pallas_call(
        functools.partial(_gaussian_noise_kernel, sigma=float(sigma)),
        out_shape=jax.ShapeDtypeStruct((rows, lanes), orig_dtype),
        grid_spec=pltpu.PrefetchScalarGridSpec(
            num_scalar_prefetch=1,
            grid=grid,
            in_specs=[pl.BlockSpec((tile_r, lanes), lambda i, seed_ref: (i, 0))],
            out_specs=pl.BlockSpec((tile_r, lanes), lambda i, seed_ref: (i, 0)),
        ),
        compiler_params=pltpu.CompilerParams(
            # Tiles are independent -> shard the loop across v7x's 2 TensorCores.
            dimension_semantics=("parallel",),
        ),
    )(seed_arr, x2d)

    out = out2d.reshape(-1)
    if pad:
        out = out[:n]
    return out.reshape(orig_shape)


if __name__ == "__main__":
    key = jax.random.PRNGKey(0)
    # Small NCHW input consistent with a CNN feature map: batch=2, channels=4, 16x16
    x = jax.random.normal(key, (2, 4, 16, 16), dtype=jnp.float32)
    sigma = 0.15

    # training=True path (the hot path of the module)
    y_train = gaussian_noise(x, sigma, seed=1234, training=True)
    y_train = jax.block_until_ready(y_train)
    assert y_train.shape == x.shape and y_train.dtype == x.dtype

    # sanity: noise has roughly the right scale and mean ~ 0
    diff = y_train - x
    assert jnp.abs(jnp.mean(diff)) < 0.05
    assert 0.05 < jnp.std(diff) < 0.3

    # eval path is identity
    y_eval = gaussian_noise(x, sigma, seed=1234, training=False)
    y_eval = jax.block_until_ready(y_eval)
    assert jnp.array_equal(y_eval, x)

    print("KERNEL_OK")
</pallas_src>

<mosaic_0001>
module attributes {stable_mosaic.version = 11 : i64} {
  func.func @_gaussian_noise_kernel(%arg0: i32, %arg1: memref<1xi32, #tpu.memory_space<smem>>, %arg2: memref<2x1024xf32, #tpu.memory_space<vmem>>, %arg3: memref<2x1024xf32, #tpu.memory_space<vmem>>) attributes {dimension_semantics = [#tpu.dimension_semantics<parallel>], iteration_bounds = array<i64: 1>, scalar_prefetch = 1 : i64, scratch_operands = 0 : i64, tpu.core_type = #tpu.core_type<tc>, window_params = [{transform_indices = @transform_0, window_bounds = array<i64: 2, 1024>}, {transform_indices = @transform_1, window_bounds = array<i64: 2, 1024>}]} {
    %c2048_i32 = arith.constant 2048 : i32
    %0 = arith.muli %arg0, %c2048_i32 : i32
    %1 = tpu.iota {dimensions = array<i32: 0>} : vector<2x1024xi32>
    %2 = tpu.iota {dimensions = array<i32: 1>} : vector<2x1024xi32>
    %c1024_i32 = arith.constant 1024 : i32
    %3 = vector.broadcast %c1024_i32 : i32 to vector<2x1024xi32>
    %4 = arith.muli %1, %3 : vector<2x1024xi32>
    %5 = vector.broadcast %0 : i32 to vector<2x1024xi32>
    %6 = arith.addi %5, %4 : vector<2x1024xi32>
    %7 = arith.addi %6, %2 : vector<2x1024xi32>
    %c0 = arith.constant 0 : index
    %8 = memref.load %arg1[%c0] : memref<1xi32, #tpu.memory_space<smem>>
    %c-1640531527_i32 = arith.constant -1640531527 : i32
    %9 = arith.muli %8, %c-1640531527_i32 : i32
    %10 = vector.broadcast %9 : i32 to vector<2x1024xi32>
    %11 = arith.xori %7, %10 : vector<2x1024xi32>
    %c16_i32 = arith.constant 16 : i32
    %12 = vector.broadcast %c16_i32 : i32 to vector<2x1024xi32>
    %13 = arith.shrui %11, %12 : vector<2x1024xi32>
    %14 = arith.xori %11, %13 : vector<2x1024xi32>
    %c-2048144789_i32 = arith.constant -2048144789 : i32
    %15 = vector.broadcast %c-2048144789_i32 : i32 to vector<2x1024xi32>
    %16 = arith.muli %14, %15 : vector<2x1024xi32>
    %c13_i32 = arith.constant 13 : i32
    %17 = vector.broadcast %c13_i32 : i32 to vector<2x1024xi32>
    %18 = arith.shrui %16, %17 : vector<2x1024xi32>
    %19 = arith.xori %16, %18 : vector<2x1024xi32>
    %c-1028477387_i32 = arith.constant -1028477387 : i32
    %20 = vector.broadcast %c-1028477387_i32 : i32 to vector<2x1024xi32>
    %21 = arith.muli %19, %20 : vector<2x1024xi32>
    %c16_i32_0 = arith.constant 16 : i32
    %22 = vector.broadcast %c16_i32_0 : i32 to vector<2x1024xi32>
    %23 = arith.shrui %21, %22 : vector<2x1024xi32>
    %24 = arith.xori %21, %23 : vector<2x1024xi32>
    %cst = arith.constant 0.000000e+00 : f32
    %25 = vector.broadcast %cst : f32 to vector<2x1024xf32>
    %c-1640531527_i32_1 = arith.constant -1640531527 : i32
    %26 = vector.broadcast %c-1640531527_i32_1 : i32 to vector<2x1024xi32>
    %27 = arith.addi %24, %26 : vector<2x1024xi32>
    %c16_i32_2 = arith.constant 16 : i32
    %28 = vector.broadcast %c16_i32_2 : i32 to vector<2x1024xi32>
    %29 = arith.shrui %27, %28 : vector<2x1024xi32>
    %30 = arith.xori %27, %29 : vector<2x1024xi32>
    %c-2048144789_i32_3 = arith.constant -2048144789 : i32
    %31 = vector.broadcast %c-2048144789_i32_3 : i32 to vector<2x1024xi32>
    %32 = arith.muli %30, %31 : vector<2x1024xi32>
    %c13_i32_4 = arith.constant 13 : i32
    %33 = vector.broadcast %c13_i32_4 : i32 to vector<2x1024xi32>
    %34 = arith.shrui %32, %33 : vector<2x1024xi32>
    %35 = arith.xori %32, %34 : vector<2x1024xi32>
    %c-1028477387_i32_5 = arith.constant -1028477387 : i32
    %36 = vector.broadcast %c-1028477387_i32_5 : i32 to vector<2x1024xi32>
    %37 = arith.muli %35, %36 : vector<2x1024xi32>
    %c16_i32_6 = arith.constant 16 : i32
    %38 = vector.broadcast %c16_i32_6 : i32 to vector<2x1024xi32>
    %39 = arith.shrui %37, %38 : vector<2x1024xi32>
    %40 = arith.xori %37, %39 : vector<2x1024xi32>
    %c65535_i32 = arith.constant 65535 : i32
    %41 = vector.broadcast %c65535_i32 : i32 to vector<2x1024xi32>
    %42 = arith.andi %40, %41 : vector<2x1024xi32>
    %43 = arith.sitofp %42 : vector<2x1024xi32> to vector<2x1024xf32>
    %44 = arith.addf %25, %43 : vector<2x1024xf32>
    %c16_i32_7 = arith.constant 16 : i32
    %45 = vector.broadcast %c16_i32_7 : i32 to vector<2x1024xi32>
    %46 = arith.shrui %40, %45 : vector<2x1024xi32>
    %47 = arith.sitofp %46 : vector<2x1024xi32> to vector<2x1024xf32>
    %48 = arith.addf %44, %47 : vector<2x1024xf32>
    %c-1640531527_i32_8 = arith.constant -1640531527 : i32
    %49 = vector.broadcast %c-1640531527_i32_8 : i32 to vector<2x1024xi32>
    %50 = arith.addi %40, %49 : vector<2x1024xi32>
    %c16_i32_9 = arith.constant 16 : i32
    %51 = vector.broadcast %c16_i32_9 : i32 to vector<2x1024xi32>
    %52 = arith.shrui %50, %51 : vector<2x1024xi32>
    %53 = arith.xori %50, %52 : vector<2x1024xi32>
    %c-2048144789_i32_10 = arith.constant -2048144789 : i32
    %54 = vector.broadcast %c-2048144789_i32_10 : i32 to vector<2x1024xi32>
    %55 = arith.muli %53, %54 : vector<2x1024xi32>
    %c13_i32_11 = arith.constant 13 : i32
    %56 = vector.broadcast %c13_i32_11 : i32 to vector<2x1024xi32>
    %57 = arith.shrui %55, %56 : vector<2x1024xi32>
    %58 = arith.xori %55, %57 : vector<2x1024xi32>
    %c-1028477387_i32_12 = arith.constant -1028477387 : i32
    %59 = vector.broadcast %c-1028477387_i32_12 : i32 to vector<2x1024xi32>
    %60 = arith.muli %58, %59 : vector<2x1024xi32>
    %c16_i32_13 = arith.constant 16 : i32
    %61 = vector.broadcast %c16_i32_13 : i32 to vector<2x1024xi32>
    %62 = arith.shrui %60, %61 : vector<2x1024xi32>
    %63 = arith.xori %60, %62 : vector<2x1024xi32>
    %c65535_i32_14 = arith.constant 65535 : i32
    %64 = vector.broadcast %c65535_i32_14 : i32 to vector<2x1024xi32>
    %65 = arith.andi %63, %64 : vector<2x1024xi32>
    %66 = arith.sitofp %65 : vector<2x1024xi32> to vector<2x1024xf32>
    %67 = arith.addf %48, %66 : vector<2x1024xf32>
    %c16_i32_15 = arith.constant 16 : i32
    %68 = vector.broadcast %c16_i32_15 : i32 to vector<2x1024xi32>
    %69 = arith.shrui %63, %68 : vector<2x1024xi32>
    %70 = arith.sitofp %69 : vector<2x1024xi32> to vector<2x1024xf32>
    %71 = arith.addf %67, %70 : vector<2x1024xf32>
    %c-1640531527_i32_16 = arith.constant -1640531527 : i32
    %72 = vector.broadcast %c-1640531527_i32_16 : i32 to vector<2x1024xi32>
    %73 = arith.addi %63, %72 : vector<2x1024xi32>
    %c16_i32_17 = arith.constant 16 : i32
    %74 = vector.broadcast %c16_i32_17 : i32 to vector<2x1024xi32>
    %75 = arith.shrui %73, %74 : vector<2x1024xi32>
    %76 = arith.xori %73, %75 : vector<2x1024xi32>
    %c-2048144789_i32_18 = arith.constant -2048144789 : i32
    %77 = vector.broadcast %c-2048144789_i32_18 : i32 to vector<2x1024xi32>
    %78 = arith.muli %76, %77 : vector<2x1024xi32>
    %c13_i32_19 = arith.constant 13 : i32
    %79 = vector.broadcast %c13_i32_19 : i32 to vector<2x1024xi32>
    %80 = arith.shrui %78, %79 : vector<2x1024xi32>
    %81 = arith.xori %78, %80 : vector<2x1024xi32>
    %c-1028477387_i32_20 = arith.constant -1028477387 : i32
    %82 = vector.broadcast %c-1028477387_i32_20 : i32 to vector<2x1024xi32>
    %83 = arith.muli %81, %82 : vector<2x1024xi32>
    %c16_i32_21 = arith.constant 16 : i32
    %84 = vector.broadcast %c16_i32_21 : i32 to vector<2x1024xi32>
    %85 = arith.shrui %83, %84 : vector<2x1024xi32>
    %86 = arith.xori %83, %85 : vector<2x1024xi32>
    %c65535_i32_22 = arith.constant 65535 : i32
    %87 = vector.broadcast %c65535_i32_22 : i32 to vector<2x1024xi32>
    %88 = arith.andi %86, %87 : vector<2x1024xi32>
    %89 = arith.sitofp %88 : vector<2x1024xi32> to vector<2x1024xf32>
    %90 = arith.addf %71, %89 : vector<2x1024xf32>
    %c16_i32_23 = arith.constant 16 : i32
    %91 = vector.broadcast %c16_i32_23 : i32 to vector<2x1024xi32>
    %92 = arith.shrui %86, %91 : vector<2x1024xi32>
    %93 = arith.sitofp %92 : vector<2x1024xi32> to vector<2x1024xf32>
    %94 = arith.addf %90, %93 : vector<2x1024xf32>
    %c-1640531527_i32_24 = arith.constant -1640531527 : i32
    %95 = vector.broadcast %c-1640531527_i32_24 : i32 to vector<2x1024xi32>
    %96 = arith.addi %86, %95 : vector<2x1024xi32>
    %c16_i32_25 = arith.constant 16 : i32
    %97 = vector.broadcast %c16_i32_25 : i32 to vector<2x1024xi32>
    %98 = arith.shrui %96, %97 : vector<2x1024xi32>
    %99 = arith.xori %96, %98 : vector<2x1024xi32>
    %c-2048144789_i32_26 = arith.constant -2048144789 : i32
    %100 = vector.broadcast %c-2048144789_i32_26 : i32 to vector<2x1024xi32>
    %101 = arith.muli %99, %100 : vector<2x1024xi32>
    %c13_i32_27 = arith.constant 13 : i32
    %102 = vector.broadcast %c13_i32_27 : i32 to vector<2x1024xi32>
    %103 = arith.shrui %101, %102 : vector<2x1024xi32>
    %104 = arith.xori %101, %103 : vector<2x1024xi32>
    %c-1028477387_i32_28 = arith.constant -1028477387 : i32
    %105 = vector.broadcast %c-1028477387_i32_28 : i32 to vector<2x1024xi32>
    %106 = arith.muli %104, %105 : vector<2x1024xi32>
    %c16_i32_29 = arith.constant 16 : i32
    %107 = vector.broadcast %c16_i32_29 : i32 to vector<2x1024xi32>
    %108 = arith.shrui %106, %107 : vector<2x1024xi32>
    %109 = arith.xori %106, %108 : vector<2x1024xi32>
    %c65535_i32_30 = arith.constant 65535 : i32
    %110 = vector.broadcast %c65535_i32_30 : i32 to vector<2x1024xi32>
    %111 = arith.andi %109, %110 : vector<2x1024xi32>
    %112 = arith.sitofp %111 : vector<2x1024xi32> to vector<2x1024xf32>
    %113 = arith.addf %94, %112 : vector<2x1024xf32>
    %c16_i32_31 = arith.constant 16 : i32
    %114 = vector.broadcast %c16_i32_31 : i32 to vector<2x1024xi32>
    %115 = arith.shrui %109, %114 : vector<2x1024xi32>
    %116 = arith.sitofp %115 : vector<2x1024xi32> to vector<2x1024xf32>
    %117 = arith.addf %113, %116 : vector<2x1024xf32>
    %cst_32 = arith.constant 2.621400e+05 : f32
    %118 = vector.broadcast %cst_32 : f32 to vector<2x1024xf32>
    %119 = arith.subf %117, %118 : vector<2x1024xf32>
    %cst_33 = arith.constant 2.80321865E-6 : f32
    %120 = vector.broadcast %cst_33 : f32 to vector<2x1024xf32>
    %121 = arith.mulf %119, %120 : vector<2x1024xf32>
    %c0_34 = arith.constant 0 : index
    %c0_35 = arith.constant 0 : index
    %122 = vector.load %arg2[%c0_34, %c0_35] : memref<2x1024xf32, #tpu.memory_space<vmem>>, vector<2x1024xf32>
    %123 = arith.addf %122, %121 : vector<2x1024xf32>
    %c0_36 = arith.constant 0 : index
    %c0_37 = arith.constant 0 : index
    %124 = vector.load %arg3[%c0_36, %c0_37] : memref<2x1024xf32, #tpu.memory_space<vmem>>, vector<2x1024xf32>
    tpu.vector_store %arg3[%c0_36, %c0_37], %123 {strides = array<i32>} : memref<2x1024xf32, #tpu.memory_space<vmem>>, vector<2x1024xf32>,
    return
  }
  func.func @transform_0(%arg0: i32, %arg1: memref<1xi32, #tpu.memory_space<smem>>) -> (i32, i32) {
    %c0_i32 = arith.constant 0 : i32
    %c0_i32_0 = arith.constant 0 : i32
    return %arg0, %c0_i32 : i32, i32
  }
  func.func @transform_1(%arg0: i32, %arg1: memref<1xi32, #tpu.memory_space<smem>>) -> (i32, i32) {
    %c0_i32 = arith.constant 0 : i32
    %c0_i32_0 = arith.constant 0 : i32
    return %arg0, %c0_i32 : i32, i32
  }
}

</mosaic_0001>

<llo_original>
// kernel: tpu_custom_call.1
$region0: #{tpu_custom_call.1}
  #allocation0 [shape = 'u32[]', space=smem, size = 0x4, offset = 0x4, fixed_abs, tag = 'smem constant byte address 0x4 - core index']
  #allocation1 [shape = 'u32[144,128]{1,0:T(1,128)}', space=vmem, size = 0x12000, scoped, tag = 'internal scratch']
  #allocation2 [shape = 's32[1]{0}', space=sflag, size = 0x4, scoped, tag = 'scoped memory for tpu_custom_call.1']
  #allocation3 [shape = 's32[1]{0:T(128)S(6)}', space=smem, size = 0x200, scoped, tag = 'prefetched SMEM operand 0']
  %s0 = inlined_call_operand.<no memory space> [shape: s32[1], index: 0, kind: input, shape index: {}]
  %s1 = inlined_call_operand.hbm [shape: f32[2,1024], index: 1, kind: input, shape index: {}]
  %s2 = inlined_call_operand.hbm [shape: f32[2,1024], index: 2, kind: output, shape index: {}]
  %s3 = sld [smem:[#allocation0]]
  $region18: #{tpu_custom_call.1} parent=0
    _
  %s5 = ssub.s32 1, %s3
  %s6 = scalar_select 0, %s5, %s3
  %7 = sst [smem:[#allocation3]] %s0
  $region1: #{tpu_custom_call.1} parent=0
    #allocation4 [shape = 'u8[8192]{0}', space=vmem, size = 0x2000, scoped, tag = 'input window, operand 1, single buffered']
    #allocation5 [shape = 's32[1]{0}', space=sflag, size = 0x4, scoped, tag = 'scoped memory for tpu_custom_call.1']
    #allocation6 [shape = 's32[1]{0}', space=sflag, size = 0x4, scoped, tag = 'scoped memory for tpu_custom_call.1']
    #allocation7 [shape = 'u8[8192]{0}', space=vmem, size = 0x2000, scoped, tag = 'output window, operand 0, single buffered']
    %8 = vsyncpa [#allocation5], 0
    %9 = vsyncpa [#allocation6], 0
    // Predicated region
    $region2: #{tpu_custom_call.1} parent=1 // pred_check
      _
    $region3: #{tpu_custom_call.1} parent=1 // pred_check_branch
      %11 = sbr.rel (0) target = $region5
    $region4: #{tpu_custom_call.1} parent=1 // pred_region
      %s13 = ssub.s32 256, 256
      %14 = vsyncadd [#allocation5], %s13
      %s16 = sshll.u32 [#allocation4], 4
      %s17 = int_to_ptr.vmem [resolvable:$true] %s16
      %19 = dma.hbm_to_vmem [thread:$0]  %s1, 256, %s17, [#allocation5]
    $region5: #{tpu_custom_call.1} parent=1 // pred_fallthru
      _
    // Predicated region
    $region6: #{tpu_custom_call.1} parent=1 // pred_check
      _
    $region7: #{tpu_custom_call.1} parent=1 // pred_check_branch
      %21 = sbr.rel (0) target = $region9
    $region8: #{tpu_custom_call.1} parent=1 // pred_region
      %22 = dma.done [#allocation5], 256
    $region9: #{tpu_custom_call.1} parent=1 // pred_fallthru
      _
    %s23 = smul.u32 0, 2048
    %v24 = vlaneseq
    %v25 = vshrl.u32 %v24, 7
    %v26 = vlaneseq
    %v27 = vand.u32 %v26, 127
    %v28 = vadd.s32 %v27, 128
    %v29 = vadd.s32 %v27, 256
    %v30 = vadd.s32 %v27, 384
    %v31 = vadd.s32 %v27, 512
    %v32 = vadd.s32 %v27, 640
    %v33 = vadd.s32 %v27, 768
    %v34 = vadd.s32 %v27, 896
    %v35 = vmul.u32 %v25, 1024
    %v36 = vstv %s23
    %v37 = vadd.s32 %v36, %v35
    %v38 = vadd.s32 %v37, %v27
    %v39 = vadd.s32 %v37, %v28
    %v40 = vadd.s32 %v37, %v29
    %v41 = vadd.s32 %v37, %v30
    %v42 = vadd.s32 %v37, %v31
    %v43 = vadd.s32 %v37, %v32
    %v44 = vadd.s32 %v37, %v33
    %v45 = vadd.s32 %v37, %v34
    %s46 = sld [smem:[#allocation3]]
    %s47 = smul.u32 %s46, 2654435769
    %v48 = vstv %s47
    %v49 = vxor.u32 %v38, %v48
    %v50 = vxor.u32 %v39, %v48
    %v51 = vxor.u32 %v40, %v48
    %v52 = vxor.u32 %v41, %v48
    %v53 = vxor.u32 %v42, %v48
    %v54 = vxor.u32 %v43, %v48
    %v55 = vxor.u32 %v44, %v48
    %v56 = vxor.u32 %v45, %v48
    %v57 = vshrl.u32 %v49, 16
    %v58 = vshrl.u32 %v50, 16
    %v59 = vshrl.u32 %v51, 16
    %v60 = vshrl.u32 %v52, 16
    %v61 = vshrl.u32 %v53, 16
    %v62 = vshrl.u32 %v54, 16
    %v63 = vshrl.u32 %v55, 16
    %v64 = vshrl.u32 %v56, 16
    %v65 = vxor.u32 %v49, %v57
    %v66 = vxor.u32 %v50, %v58
    %v67 = vxor.u32 %v51, %v59
    %v68 = vxor.u32 %v52, %v60
    %v69 = vxor.u32 %v53, %v61
    %v70 = vxor.u32 %v54, %v62
    %v71 = vxor.u32 %v55, %v63
    %v72 = vxor.u32 %v56, %v64
    %v73 = vmul.u32 %v65, 2246822507
    %v74 = vmul.u32 %v66, 2246822507
    %v75 = vmul.u32 %v67, 2246822507
    %v76 = vmul.u32 %v68, 2246822507
    %v77 = vmul.u32 %v69, 2246822507
    %v78 = vmul.u32 %v70, 2246822507
    %v79 = vmul.u32 %v71, 2246822507
    %v80 = vmul.u32 %v72, 2246822507
    %v81 = vshrl.u32 %v73, 13
    %v82 = vshrl.u32 %v74, 13
    %v83 = vshrl.u32 %v75, 13
    %v84 = vshrl.u32 %v76, 13
    %v85 = vshrl.u32 %v77, 13
    %v86 = vshrl.u32 %v78, 13
    %v87 = vshrl.u32 %v79, 13
    %v88 = vshrl.u32 %v80, 13
    %v89 = vxor.u32 %v73, %v81
    %v90 = vxor.u32 %v74, %v82
    %v91 = vxor.u32 %v75, %v83
    %v92 = vxor.u32 %v76, %v84
    %v93 = vxor.u32 %v77, %v85
    %v94 = vxor.u32 %v78, %v86
    %v95 = vxor.u32 %v79, %v87
    %v96 = vxor.u32 %v80, %v88
    %v97 = vmul.u32 %v89, 3266489909
    %v98 = vmul.u32 %v90, 3266489909
    %v99 = vmul.u32 %v91, 3266489909
    %v100 = vmul.u32 %v92, 3266489909
    %v101 = vmul.u32 %v93, 3266489909
    %v102 = vmul.u32 %v94, 3266489909
    %v103 = vmul.u32 %v95, 3266489909
    %v104 = vmul.u32 %v96, 3266489909
    %v105 = vshrl.u32 %v97, 16
    %v106 = vshrl.u32 %v98, 16
    %v107 = vshrl.u32 %v99, 16
    %v108 = vshrl.u32 %v100, 16
    %v109 = vshrl.u32 %v101, 16
    %v110 = vshrl.u32 %v102, 16
    %v111 = vshrl.u32 %v103, 16
    %v112 = vshrl.u32 %v104, 16
    %v113 = vxor.u32 %v97, %v105
    %v114 = vxor.u32 %v98, %v106
    %v115 = vxor.u32 %v99, %v107
    %v116 = vxor.u32 %v100, %v108
    %v117 = vxor.u32 %v101, %v109
    %v118 = vxor.u32 %v102, %v110
    %v119 = vxor.u32 %v103, %v111
    %v120 = vxor.u32 %v104, %v112
    %v121 = vadd.s32 %v113, 2654435769
    %v122 = vadd.s32 %v114, 2654435769
    %v123 = vadd.s32 %v115, 2654435769
    %v124 = vadd.s32 %v116, 2654435769
    %v125 = vadd.s32 %v117, 2654435769
    %v126 = vadd.s32 %v118, 2654435769
    %v127 = vadd.s32 %v119, 2654435769
    %v128 = vadd.s32 %v120, 2654435769
    %v129 = vshrl.u32 %v121, 16
    %v130 = vshrl.u32 %v122, 16
    %v131 = vshrl.u32 %v123, 16
    %v132 = vshrl.u32 %v124, 16
    %v133 = vshrl.u32 %v125, 16
    %v134 = vshrl.u32 %v126, 16
    %v135 = vshrl.u32 %v127, 16
    %v136 = vshrl.u32 %v128, 16
    %v137 = vxor.u32 %v121, %v129
    %v138 = vxor.u32 %v122, %v130
    %v139 = vxor.u32 %v123, %v131
    %v140 = vxor.u32 %v124, %v132
    %v141 = vxor.u32 %v125, %v133
    %v142 = vxor.u32 %v126, %v134
    %v143 = vxor.u32 %v127, %v135
    %v144 = vxor.u32 %v128, %v136
    %v145 = vmul.u32 %v137, 2246822507
    %v146 = vmul.u32 %v138, 2246822507
    %v147 = vmul.u32 %v139, 2246822507
    %v148 = vmul.u32 %v140, 2246822507
    %v149 = vmul.u32 %v141, 2246822507
    %v150 = vmul.u32 %v142, 2246822507
    %v151 = vmul.u32 %v143, 2246822507
    %v152 = vmul.u32 %v144, 2246822507
    %v153 = vshrl.u32 %v145, 13
    %v154 = vshrl.u32 %v146, 13
    %v155 = vshrl.u32 %v147, 13
    %v156 = vshrl.u32 %v148, 13
    %v157 = vshrl.u32 %v149, 13
    %v158 = vshrl.u32 %v150, 13
    %v159 = vshrl.u32 %v151, 13
    %v160 = vshrl.u32 %v152, 13
    %v161 = vxor.u32 %v145, %v153
    %v162 = vxor.u32 %v146, %v154
    %v163 = vxor.u32 %v147, %v155
    %v164 = vxor.u32 %v148, %v156
    %v165 = vxor.u32 %v149, %v157
    %v166 = vxor.u32 %v150, %v158
    %v167 = vxor.u32 %v151, %v159
    %v168 = vxor.u32 %v152, %v160
    %v169 = vmul.u32 %v161, 3266489909
    %v170 = vmul.u32 %v162, 3266489909
    %v171 = vmul.u32 %v163, 3266489909
    %v172 = vmul.u32 %v164, 3266489909
    %v173 = vmul.u32 %v165, 3266489909
    %v174 = vmul.u32 %v166, 3266489909
    %v175 = vmul.u32 %v167, 3266489909
    %v176 = vmul.u32 %v168, 3266489909
    %v177 = vshrl.u32 %v169, 16
    %v178 = vshrl.u32 %v170, 16
    %v179 = vshrl.u32 %v171, 16
    %v180 = vshrl.u32 %v172, 16
    %v181 = vshrl.u32 %v173, 16
    %v182 = vshrl.u32 %v174, 16
    %v183 = vshrl.u32 %v175, 16
    %v184 = vshrl.u32 %v176, 16
    %v185 = vxor.u32 %v169, %v177
    %v186 = vxor.u32 %v170, %v178
    %v187 = vxor.u32 %v171, %v179
    %v188 = vxor.u32 %v172, %v180
    %v189 = vxor.u32 %v173, %v181
    %v190 = vxor.u32 %v174, %v182
    %v191 = vxor.u32 %v175, %v183
    %v192 = vxor.u32 %v176, %v184
    %v193 = vand.u32 %v185, 65535
    %v194 = vand.u32 %v186, 65535
    %v195 = vand.u32 %v187, 65535
    %v196 = vand.u32 %v188, 65535
    %v197 = vand.u32 %v189, 65535
    %v198 = vand.u32 %v190, 65535
    %v199 = vand.u32 %v191, 65535
    %v200 = vand.u32 %v192, 65535
    %v201 = vcvt.s32.f32 %v193
    %v202 = vcvt.s32.f32 %v194
    %v203 = vcvt.s32.f32 %v195
    %v204 = vcvt.s32.f32 %v196
    %v205 = vcvt.s32.f32 %v197
    %v206 = vcvt.s32.f32 %v198
    %v207 = vcvt.s32.f32 %v199
    %v208 = vcvt.s32.f32 %v200
    %v209 = vadd.f32 %v201, 0.0
    %v210 = vadd.f32 %v202, 0.0
    %v211 = vadd.f32 %v203, 0.0
    %v212 = vadd.f32 %v204, 0.0
    %v213 = vadd.f32 %v205, 0.0
    %v214 = vadd.f32 %v206, 0.0
    %v215 = vadd.f32 %v207, 0.0
    %v216 = vadd.f32 %v208, 0.0
    %v217 = vshrl.u32 %v185, 16
    %v218 = vshrl.u32 %v186, 16
    %v219 = vshrl.u32 %v187, 16
    %v220 = vshrl.u32 %v188, 16
    %v221 = vshrl.u32 %v189, 16
    %v222 = vshrl.u32 %v190, 16
    %v223 = vshrl.u32 %v191, 16
    %v224 = vshrl.u32 %v192, 16
    %v225 = vcvt.s32.f32 %v217
    %v226 = vcvt.s32.f32 %v218
    %v227 = vcvt.s32.f32 %v219
    %v228 = vcvt.s32.f32 %v220
    %v229 = vcvt.s32.f32 %v221
    %v230 = vcvt.s32.f32 %v222
    %v231 = vcvt.s32.f32 %v223
    %v232 = vcvt.s32.f32 %v224
    %v233 = vadd.f32 %v209, %v225
    %v234 = vadd.f32 %v210, %v226
    %v235 = vadd.f32 %v211, %v227
    %v236 = vadd.f32 %v212, %v228
    %v237 = vadd.f32 %v213, %v229
    %v238 = vadd.f32 %v214, %v230
    %v239 = vadd.f32 %v215, %v231
    %v240 = vadd.f32 %v216, %v232
    %v241 = vadd.s32 %v185, 2654435769
    %v242 = vadd.s32 %v186, 2654435769
    %v243 = vadd.s32 %v187, 2654435769
    %v244 = vadd.s32 %v188, 2654435769
    %v245 = vadd.s32 %v189, 2654435769
    %v246 = vadd.s32 %v190, 2654435769
    %v247 = vadd.s32 %v191, 2654435769
    %v248 = vadd.s32 %v192, 2654435769
    %v249 = vshrl.u32 %v241, 16
    %v250 = vshrl.u32 %v242, 16
    %v251 = vshrl.u32 %v243, 16
    %v252 = vshrl.u32 %v244, 16
    %v253 = vshrl.u32 %v245, 16
    %v254 = vshrl.u32 %v246, 16
    %v255 = vshrl.u32 %v247, 16
    %v256 = vshrl.u32 %v248, 16
    %v257 = vxor.u32 %v241, %v249
    %v258 = vxor.u32 %v242, %v250
    %v259 = vxor.u32 %v243, %v251
    %v260 = vxor.u32 %v244, %v252
    %v261 = vxor.u32 %v245, %v253
    %v262 = vxor.u32 %v246, %v254
    %v263 = vxor.u32 %v247, %v255
    %v264 = vxor.u32 %v248, %v256
    %v265 = vmul.u32 %v257, 2246822507
    %v266 = vmul.u32 %v258, 2246822507
    %v267 = vmul.u32 %v259, 2246822507
    %v268 = vmul.u32 %v260, 2246822507
    %v269 = vmul.u32 %v261, 2246822507
    %v270 = vmul.u32 %v262, 2246822507
    %v271 = vmul.u32 %v263, 2246822507
    %v272 = vmul.u32 %v264, 2246822507
    %v273 = vshrl.u32 %v265, 13
    %v274 = vshrl.u32 %v266, 13
    %v275 = vshrl.u32 %v267, 13
    %v276 = vshrl.u32 %v268, 13
    %v277 = vshrl.u32 %v269, 13
    %v278 = vshrl.u32 %v270, 13
    %v279 = vshrl.u32 %v271, 13
    %v280 = vshrl.u32 %v272, 13
    %v281 = vxor.u32 %v265, %v273
    %v282 = vxor.u32 %v266, %v274
    %v283 = vxor.u32 %v267, %v275
    %v284 = vxor.u32 %v268, %v276
    %v285 = vxor.u32 %v269, %v277
    %v286 = vxor.u32 %v270, %v278
    %v287 = vxor.u32 %v271, %v279
    %v288 = vxor.u32 %v272, %v280
    %v289 = vmul.u32 %v281, 3266489909
    %v290 = vmul.u32 %v282, 3266489909
    %v291 = vmul.u32 %v283, 3266489909
    %v292 = vmul.u32 %v284, 3266489909
    %v293 = vmul.u32 %v285, 3266489909
    %v294 = vmul.u32 %v286, 3266489909
    %v295 = vmul.u32 %v287, 3266489909
    %v296 = vmul.u32 %v288, 3266489909
    %v297 = vshrl.u32 %v289, 16
    %v298 = vshrl.u32 %v290, 16
    %v299 = vshrl.u32 %v291, 16
    %v300 = vshrl.u32 %v292, 16
    %v301 = vshrl.u32 %v293, 16
    %v302 = vshrl.u32 %v294, 16
    %v303 = vshrl.u32 %v295, 16
    %v304 = vshrl.u32 %v296, 16
    %v305 = vxor.u32 %v289, %v297
    %v306 = vxor.u32 %v290, %v298
    %v307 = vxor.u32 %v291, %v299
    %v308 = vxor.u32 %v292, %v300
    %v309 = vxor.u32 %v293, %v301
    %v310 = vxor.u32 %v294, %v302
    %v311 = vxor.u32 %v295, %v303
    %v312 = vxor.u32 %v296, %v304
    %v313 = vand.u32 %v305, 65535
    %v314 = vand.u32 %v306, 65535
    %v315 = vand.u32 %v307, 65535
    %v316 = vand.u32 %v308, 65535
    %v317 = vand.u32 %v309, 65535
    %v318 = vand.u32 %v310, 65535
    %v319 = vand.u32 %v311, 65535
    %v320 = vand.u32 %v312, 65535
    %v321 = vcvt.s32.f32 %v313
    %v322 = vcvt.s32.f32 %v314
    %v323 = vcvt.s32.f32 %v315
    %v324 = vcvt.s32.f32 %v316
    %v325 = vcvt.s32.f32 %v317
    %v326 = vcvt.s32.f32 %v318
    %v327 = vcvt.s32.f32 %v319
    %v328 = vcvt.s32.f32 %v320
    %v329 = vadd.f32 %v233, %v321
    %v330 = vadd.f32 %v234, %v322
    %v331 = vadd.f32 %v235, %v323
    %v332 = vadd.f32 %v236, %v324
    %v333 = vadd.f32 %v237, %v325
    %v334 = vadd.f32 %v238, %v326
    %v335 = vadd.f32 %v239, %v327
    %v336 = vadd.f32 %v240, %v328
    %v337 = vshrl.u32 %v305, 16
    %v338 = vshrl.u32 %v306, 16
    %v339 = vshrl.u32 %v307, 16
    %v340 = vshrl.u32 %v308, 16
    %v341 = vshrl.u32 %v309, 16
    %v342 = vshrl.u32 %v310, 16
    %v343 = vshrl.u32 %v311, 16
    %v344 = vshrl.u32 %v312, 16
    %v345 = vcvt.s32.f32 %v337
    %v346 = vcvt.s32.f32 %v338
    %v347 = vcvt.s32.f32 %v339
    %v348 = vcvt.s32.f32 %v340
    %v349 = vcvt.s32.f32 %v341
    %v350 = vcvt.s32.f32 %v342
    %v351 = vcvt.s32.f32 %v343
    %v352 = vcvt.s32.f32 %v344
    %v353 = vadd.f32 %v329, %v345
    %v354 = vadd.f32 %v330, %v346
    %v355 = vadd.f32 %v331, %v347
    %v356 = vadd.f32 %v332, %v348
    %v357 = vadd.f32 %v333, %v349
    %v358 = vadd.f32 %v334, %v350
    %v359 = vadd.f32 %v335, %v351
    %v360 = vadd.f32 %v336, %v352
    %v361 = vadd.s32 %v305, 2654435769
    %v362 = vadd.s32 %v306, 2654435769
    %v363 = vadd.s32 %v307, 2654435769
    %v364 = vadd.s32 %v308, 2654435769
    %v365 = vadd.s32 %v309, 2654435769
    %v366 = vadd.s32 %v310, 2654435769
    %v367 = vadd.s32 %v311, 2654435769
    %v368 = vadd.s32 %v312, 2654435769
    %v369 = vshrl.u32 %v361, 16
    %v370 = vshrl.u32 %v362, 16
    %v371 = vshrl.u32 %v363, 16
    %v372 = vshrl.u32 %v364, 16
    %v373 = vshrl.u32 %v365, 16
    %v374 = vshrl.u32 %v366, 16
    %v375 = vshrl.u32 %v367, 16
    %v376 = vshrl.u32 %v368, 16
    %v377 = vxor.u32 %v361, %v369
    %v378 = vxor.u32 %v362, %v370
    %v379 = vxor.u32 %v363, %v371
    %v380 = vxor.u32 %v364, %v372
    %v381 = vxor.u32 %v365, %v373
    %v382 = vxor.u32 %v366, %v374
    %v383 = vxor.u32 %v367, %v375
    %v384 = vxor.u32 %v368, %v376
    %v385 = vmul.u32 %v377, 2246822507
    %v386 = vmul.u32 %v378, 2246822507
    %v387 = vmul.u32 %v379, 2246822507
    %v388 = vmul.u32 %v380, 2246822507
    %v389 = vmul.u32 %v381, 2246822507
    %v390 = vmul.u32 %v382, 2246822507
    %v391 = vmul.u32 %v383, 2246822507
    %v392 = vmul.u32 %v384, 2246822507
    %v393 = vshrl.u32 %v385, 13
    %v394 = vshrl.u32 %v386, 13
    %v395 = vshrl.u32 %v387, 13
    %v396 = vshrl.u32 %v388, 13
    %v397 = vshrl.u32 %v389, 13
    %v398 = vshrl.u32 %v390, 13
    %v399 = vshrl.u32 %v391, 13
    %v400 = vshrl.u32 %v392, 13
    %v401 = vxor.u32 %v385, %v393
    %v402 = vxor.u32 %v386, %v394
    %v403 = vxor.u32 %v387, %v395
    %v404 = vxor.u32 %v388, %v396
    %v405 = vxor.u32 %v389, %v397
    %v406 = vxor.u32 %v390, %v398
    %v407 = vxor.u32 %v391, %v399
    %v408 = vxor.u32 %v392, %v400
    %v409 = vmul.u32 %v401, 3266489909
    %v410 = vmul.u32 %v402, 3266489909
    %v411 = vmul.u32 %v403, 3266489909
    %v412 = vmul.u32 %v404, 3266489909
    %v413 = vmul.u32 %v405, 3266489909
    %v414 = vmul.u32 %v406, 3266489909
    %v415 = vmul.u32 %v407, 3266489909
    %v416 = vmul.u32 %v408, 3266489909
    %v417 = vshrl.u32 %v409, 16
    %v418 = vshrl.u32 %v410, 16
    %v419 = vshrl.u32 %v411, 16
    %v420 = vshrl.u32 %v412, 16
    %v421 = vshrl.u32 %v413, 16
    %v422 = vshrl.u32 %v414, 16
    %v423 = vshrl.u32 %v415, 16
    %v424 = vshrl.u32 %v416, 16
    %v425 = vxor.u32 %v409, %v417
    %v426 = vxor.u32 %v410, %v418
    %v427 = vxor.u32 %v411, %v419
    %v428 = vxor.u32 %v412, %v420
    %v429 = vxor.u32 %v413, %v421
    %v430 = vxor.u32 %v414, %v422
    %v431 = vxor.u32 %v415, %v423
    %v432 = vxor.u32 %v416, %v424
    %v433 = vand.u32 %v425, 65535
    %v434 = vand.u32 %v426, 65535
    %v435 = vand.u32 %v427, 65535
    %v436 = vand.u32 %v428, 65535
    %v437 = vand.u32 %v429, 65535
    %v438 = vand.u32 %v430, 65535
    %v439 = vand.u32 %v431, 65535
    %v440 = vand.u32 %v432, 65535
    %v441 = vcvt.s32.f32 %v433
    %v442 = vcvt.s32.f32 %v434
    %v443 = vcvt.s32.f32 %v435
    %v444 = vcvt.s32.f32 %v436
    %v445 = vcvt.s32.f32 %v437
    %v446 = vcvt.s32.f32 %v438
    %v447 = vcvt.s32.f32 %v439
    %v448 = vcvt.s32.f32 %v440
    %v449 = vadd.f32 %v353, %v441
    %v450 = vadd.f32 %v354, %v442
    %v451 = vadd.f32 %v355, %v443
    %v452 = vadd.f32 %v356, %v444
    %v453 = vadd.f32 %v357, %v445
    %v454 = vadd.f32 %v358, %v446
    %v455 = vadd.f32 %v359, %v447
    %v456 = vadd.f32 %v360, %v448
    %v457 = vshrl.u32 %v425, 16
    %v458 = vshrl.u32 %v426, 16
    %v459 = vshrl.u32 %v427, 16
    %v460 = vshrl.u32 %v428, 16
    %v461 = vshrl.u32 %v429, 16
    %v462 = vshrl.u32 %v430, 16
    %v463 = vshrl.u32 %v431, 16
    %v464 = vshrl.u32 %v432, 16
    %v465 = vcvt.s32.f32 %v457
    %v466 = vcvt.s32.f32 %v458
    %v467 = vcvt.s32.f32 %v459
    %v468 = vcvt.s32.f32 %v460
    %v469 = vcvt.s32.f32 %v461
    %v470 = vcvt.s32.f32 %v462
    %v471 = vcvt.s32.f32 %v463
    %v472 = vcvt.s32.f32 %v464
    %v473 = vadd.f32 %v449, %v465
    %v474 = vadd.f32 %v450, %v466
    %v475 = vadd.f32 %v451, %v467
    %v476 = vadd.f32 %v452, %v468
    %v477 = vadd.f32 %v453, %v469
    %v478 = vadd.f32 %v454, %v470
    %v479 = vadd.f32 %v455, %v471
    %v480 = vadd.f32 %v456, %v472
    %v481 = vadd.s32 %v425, 2654435769
    %v482 = vadd.s32 %v426, 2654435769
    %v483 = vadd.s32 %v427, 2654435769
    %v484 = vadd.s32 %v428, 2654435769
    %v485 = vadd.s32 %v429, 2654435769
    %v486 = vadd.s32 %v430, 2654435769
    %v487 = vadd.s32 %v431, 2654435769
    %v488 = vadd.s32 %v432, 2654435769
    %v489 = vshrl.u32 %v481, 16
    %v490 = vshrl.u32 %v482, 16
    %v491 = vshrl.u32 %v483, 16
    %v492 = vshrl.u32 %v484, 16
    %v493 = vshrl.u32 %v485, 16
    %v494 = vshrl.u32 %v486, 16
    %v495 = vshrl.u32 %v487, 16
    %v496 = vshrl.u32 %v488, 16
    %v497 = vxor.u32 %v481, %v489
    %v498 = vxor.u32 %v482, %v490
    %v499 = vxor.u32 %v483, %v491
    %v500 = vxor.u32 %v484, %v492
    %v501 = vxor.u32 %v485, %v493
    %v502 = vxor.u32 %v486, %v494
    %v503 = vxor.u32 %v487, %v495
    %v504 = vxor.u32 %v488, %v496
    %v505 = vmul.u32 %v497, 2246822507
    %v506 = vmul.u32 %v498, 2246822507
    %v507 = vmul.u32 %v499, 2246822507
    %v508 = vmul.u32 %v500, 2246822507
    %v509 = vmul.u32 %v501, 2246822507
    %v510 = vmul.u32 %v502, 2246822507
    %v511 = vmul.u32 %v503, 2246822507
    %v512 = vmul.u32 %v504, 2246822507
    %v513 = vshrl.u32 %v505, 13
    %v514 = vshrl.u32 %v506, 13
    %v515 = vshrl.u32 %v507, 13
    %v516 = vshrl.u32 %v508, 13
    %v517 = vshrl.u32 %v509, 13
    %v518 = vshrl.u32 %v510, 13
    %v519 = vshrl.u32 %v511, 13
    %v520 = vshrl.u32 %v512, 13
    %v521 = vxor.u32 %v505, %v513
    %v522 = vxor.u32 %v506, %v514
    %v523 = vxor.u32 %v507, %v515
    %v524 = vxor.u32 %v508, %v516
    %v525 = vxor.u32 %v509, %v517
    %v526 = vxor.u32 %v510, %v518
    %v527 = vxor.u32 %v511, %v519
    %v528 = vxor.u32 %v512, %v520
    %v529 = vmul.u32 %v521, 3266489909
    %v530 = vmul.u32 %v522, 3266489909
    %v531 = vmul.u32 %v523, 3266489909
    %v532 = vmul.u32 %v524, 3266489909
    %v533 = vmul.u32 %v525, 3266489909
    %v534 = vmul.u32 %v526, 3266489909
    %v535 = vmul.u32 %v527, 3266489909
    %v536 = vmul.u32 %v528, 3266489909
    %v537 = vshrl.u32 %v529, 16
    %v538 = vshrl.u32 %v530, 16
    %v539 = vshrl.u32 %v531, 16
    %v540 = vshrl.u32 %v532, 16
    %v541 = vshrl.u32 %v533, 16
    %v542 = vshrl.u32 %v534, 16
    %v543 = vshrl.u32 %v535, 16
    %v544 = vshrl.u32 %v536, 16
    %v545 = vxor.u32 %v529, %v537
    %v546 = vxor.u32 %v530, %v538
    %v547 = vxor.u32 %v531, %v539
    %v548 = vxor.u32 %v532, %v540
    %v549 = vxor.u32 %v533, %v541
    %v550 = vxor.u32 %v534, %v542
    %v551 = vxor.u32 %v535, %v543
    %v552 = vxor.u32 %v536, %v544
    %v553 = vand.u32 %v545, 65535
    %v554 = vand.u32 %v546, 65535
    %v555 = vand.u32 %v547, 65535
    %v556 = vand.u32 %v548, 65535
    %v557 = vand.u32 %v549, 65535
    %v558 = vand.u32 %v550, 65535
    %v559 = vand.u32 %v551, 65535
    %v560 = vand.u32 %v552, 65535
    %v561 = vcvt.s32.f32 %v553
    %v562 = vcvt.s32.f32 %v554
    %v563 = vcvt.s32.f32 %v555
    %v564 = vcvt.s32.f32 %v556
    %v565 = vcvt.s32.f32 %v557
    %v566 = vcvt.s32.f32 %v558
    %v567 = vcvt.s32.f32 %v559
    %v568 = vcvt.s32.f32 %v560
    %v569 = vadd.f32 %v473, %v561
    %v570 = vadd.f32 %v474, %v562
    %v571 = vadd.f32 %v475, %v563
    %v572 = vadd.f32 %v476, %v564
    %v573 = vadd.f32 %v477, %v565
    %v574 = vadd.f32 %v478, %v566
    %v575 = vadd.f32 %v479, %v567
    %v576 = vadd.f32 %v480, %v568
    %v577 = vshrl.u32 %v545, 16
    %v578 = vshrl.u32 %v546, 16
    %v579 = vshrl.u32 %v547, 16
    %v580 = vshrl.u32 %v548, 16
    %v581 = vshrl.u32 %v549, 16
    %v582 = vshrl.u32 %v550, 16
    %v583 = vshrl.u32 %v551, 16
    %v584 = vshrl.u32 %v552, 16
    %v585 = vcvt.s32.f32 %v577
    %v586 = vcvt.s32.f32 %v578
    %v587 = vcvt.s32.f32 %v579
    %v588 = vcvt.s32.f32 %v580
    %v589 = vcvt.s32.f32 %v581
    %v590 = vcvt.s32.f32 %v582
    %v591 = vcvt.s32.f32 %v583
    %v592 = vcvt.s32.f32 %v584
    %v593 = vadd.f32 %v569, %v585
    %v594 = vadd.f32 %v570, %v586
    %v595 = vadd.f32 %v571, %v587
    %v596 = vadd.f32 %v572, %v588
    %v597 = vadd.f32 %v573, %v589
    %v598 = vadd.f32 %v574, %v590
    %v599 = vadd.f32 %v575, %v591
    %v600 = vadd.f32 %v576, %v592
    %v601 = vsub.f32 %v593, 262140.0
    %v602 = vsub.f32 %v594, 262140.0
    %v603 = vsub.f32 %v595, 262140.0
    %v604 = vsub.f32 %v596, 262140.0
    %v605 = vsub.f32 %v597, 262140.0
    %v606 = vsub.f32 %v598, 262140.0
    %v607 = vsub.f32 %v599, 262140.0
    %v608 = vsub.f32 %v600, 262140.0
    %v609 = vmul.f32 %v601, 2.8032186e-06
    %v610 = vmul.f32 %v602, 2.8032186e-06
    %v611 = vmul.f32 %v603, 2.8032186e-06
    %v612 = vmul.f32 %v604, 2.8032186e-06
    %v613 = vmul.f32 %v605, 2.8032186e-06
    %v614 = vmul.f32 %v606, 2.8032186e-06
    %v615 = vmul.f32 %v607, 2.8032186e-06
    %v616 = vmul.f32 %v608, 2.8032186e-06
    %v617 = vld [vmem:[#allocation4] sm:$0xff]
    %v618 = vld [vmem:[#allocation4 + $0x8] sm:$0xff]
    %v627 = vcombine.low %v609, %v610
    %v628 = vcombine.low %v611, %v612
    %v630 = vunpack.c.l.s4 1983009808
    %v631 = vunpack.c.0.s8 %v630
    %v632 = vlaneseq
    %v633 = vshrl.u32 %v632, 7
    %v634 = vsub.s32 %v631, %v633
    %v635 = vrot.slane %v627, %v634
    %v637 = vunpack.c.l.s4 1983009808
    %v638 = vunpack.c.0.s8 %v637
    %v639 = vlaneseq
    %v640 = vshrl.u32 %v639, 7
    %v641 = vsub.s32 %v638, %v640
    %v642 = vrot.slane %v628, %v641
    %v643 = vcombine.low %v635, %v642
    %v644 = vcombine.low %v613, %v614
    %v645 = vcombine.low %v615, %v616
    %v647 = vunpack.c.l.s4 1983009808
    %v648 = vunpack.c.0.s8 %v647
    %v649 = vlaneseq
    %v650 = vshrl.u32 %v649, 7
    %v651 = vsub.s32 %v648, %v650
    %v652 = vrot.slane %v644, %v651
    %v654 = vunpack.c.l.s4 1983009808
    %v655 = vunpack.c.0.s8 %v654
    %v656 = vlaneseq
    %v657 = vshrl.u32 %v656, 7
    %v658 = vsub.s32 %v655, %v657
    %v659 = vrot.slane %v645, %v658
    %v660 = vcombine.low %v652, %v659
    %v663 = vadd.f32 %v617, %v643
    %v664 = vadd.f32 %v618, %v660
    %665 = vst [vmem:[#allocation7] sm:$0xff] %v663
    %666 = vst [vmem:[#allocation7 + $0x8] sm:$0xff] %v664
    // Predicated region
    $region10: #{tpu_custom_call.1} parent=1 // pred_check
      _
    $region11: #{tpu_custom_call.1} parent=1 // pred_check_branch
      %668 = sbr.rel (0) target = $region13
    $region12: #{tpu_custom_call.1} parent=1 // pred_region
      %s670 = ssub.s32 256, 256
      %671 = vsyncadd [#allocation6], %s670
      %s673 = sshll.u32 [#allocation7], 4
      %s674 = int_to_ptr.vmem [resolvable:$true] %s673
      %676 = dma.vmem_to_hbm [thread:$0]  %s674, 256, %s2, [#allocation6]
    $region13: #{tpu_custom_call.1} parent=1 // pred_fallthru
      _
    // Predicated region
    $region14: #{tpu_custom_call.1} parent=1 // pred_check
      _
    $region15: #{tpu_custom_call.1} parent=1 // pred_check_branch
      %678 = sbr.rel (0) target = $region17
    $region16: #{tpu_custom_call.1} parent=1 // pred_region
      %679 = dma.done [#allocation6], 256
    $region17: #{tpu_custom_call.1} parent=1 // pred_fallthru
      _
    %680 = vsyncpa [#allocation5], 1
    %681 = vsyncpa [#allocation6], 1

</llo_original>
